<compile_context>
chip_gen: v5e
topology: v5e:2x2
jax: 0.10.0
libtpu: 0.0.40
codegen_flags: <defaults>
</compile_context>

<pallas_src>
import functools

import jax
import jax.numpy as jnp
from jax import lax
from jax.experimental import pallas as pl
from jax.experimental.pallas import tpu as pltpu


def _hypergraph_kernel(x_ref, clf_ref, emap_ref, gamma_ref, beta_ref, o_ref,
                       *, use_bf16_matmul):
    # x_ref:     (1, TN, D)  one batch element; T*N on sublanes, hidden D on lanes
    # clf_ref:   (D, E)      hyper-edge classifier weight
    # emap_ref:  (E, E)      hyper-edge mixing weight
    # gamma_ref: (1, D)      LayerNorm weight
    # beta_ref:  (1, D)      LayerNorm bias
    # o_ref:     (1, TN, D)
    feat = x_ref[0].astype(jnp.float32)                                   # (TN, D)
    mm = jnp.bfloat16 if use_bf16_matmul else jnp.float32

    # 1) hyper-edge assignment: softmax(feat @ edge_clf) over the edge (lane) axis.
    logits = jnp.dot(feat.astype(mm), clf_ref[...].astype(mm),
                     preferred_element_type=jnp.float32)                  # (TN, E)
    logits = logits - jnp.max(logits, axis=-1, keepdims=True)
    p = jnp.exp(logits)
    assign = p / jnp.sum(p, axis=-1, keepdims=True)                       # (TN, E)

    # 2) hyper-edge features H = A^T @ feat.  Contract over TN directly on the MXU via
    #    transposed-lhs dimension numbers (no materialized transpose of A).
    hyper_feat = lax.dot_general(
        assign.astype(mm), feat.astype(mm),
        dimension_numbers=(((0,), (0,)), ((), ())),
        preferred_element_type=jnp.float32)                               # (E, D)

    # 3) edge mixing + ReLU + residual on the edge features.
    mapped = jnp.dot(emap_ref[...].astype(mm), hyper_feat.astype(mm),
                     preferred_element_type=jnp.float32)                  # (E, D)
    hyper_out = jnp.maximum(mapped, 0.0) + hyper_feat                     # (E, D)

    # 4) scatter back to the T*N nodes + ReLU + residual with the input.
    y = jnp.dot(assign.astype(mm), hyper_out.astype(mm),
                preferred_element_type=jnp.float32)                       # (TN, D)
    z = jnp.maximum(y, 0.0) + feat                                        # (TN, D)

    # 5) LayerNorm over the hidden (lane) axis, eps = 1e-5, affine.
    mean = jnp.mean(z, axis=-1, keepdims=True)
    c = z - mean
    var = jnp.mean(c * c, axis=-1, keepdims=True)
    zn = c / jnp.sqrt(var + 1e-5)
    out = zn * gamma_ref[...] + beta_ref[...]                             # (TN, D)

    o_ref[0] = out.astype(o_ref.dtype)


def hypergraph_forward(x, edge_clf, edge_map, gamma, beta, *, use_bf16_matmul=False):
    """Fused HypergraphLearning forward.

    x:        (B, T, N, D)
    edge_clf: (D, E)
    edge_map: (E, E)
    gamma/beta: (D,)
    returns   (B, T, N, D)
    """
    B, T, N, D = x.shape
    TN = T * N
    E = edge_clf.shape[1]
    assert edge_clf.shape == (D, E)
    assert edge_map.shape == (E, E)
    assert gamma.shape == (D,) and beta.shape == (D,)

    # Layout plumbing outside the kernel.
    x3 = x.reshape(B, TN, D)
    gamma2 = gamma.astype(jnp.float32).reshape(1, D)
    beta2 = beta.astype(jnp.float32).reshape(1, D)

    kernel = functools.partial(_hypergraph_kernel, use_bf16_matmul=use_bf16_matmul)

    out3 = pl.pallas_call(
        kernel,
        out_shape=jax.ShapeDtypeStruct((B, TN, D), x.dtype),
        grid_spec=pltpu.PrefetchScalarGridSpec(
            num_scalar_prefetch=0,
            grid=(B,),
            in_specs=[
                pl.BlockSpec((1, TN, D), lambda b: (b, 0, 0)),   # one batch element
                pl.BlockSpec((D, E), lambda b: (0, 0)),          # edge_clf (constant map -> no re-DMA)
                pl.BlockSpec((E, E), lambda b: (0, 0)),          # edge_map
                pl.BlockSpec((1, D), lambda b: (0, 0)),          # LayerNorm gamma
                pl.BlockSpec((1, D), lambda b: (0, 0)),          # LayerNorm beta
            ],
            out_specs=pl.BlockSpec((1, TN, D), lambda b: (b, 0, 0)),
        ),
        compiler_params=pltpu.CompilerParams(
            dimension_semantics=("parallel",),
            vmem_limit_bytes=32 * 1024 * 1024,
        ),
    )(x3, edge_clf.astype(jnp.float32), edge_map.astype(jnp.float32), gamma2, beta2)

    return out3.reshape(B, T, N, D)


def hypergraph_reference(x, edge_clf, edge_map, gamma, beta):
    """Pure-JAX reference mirroring HypergraphLearning.forward (PyTorch)."""
    B, T, N, D = x.shape
    hp = jax.lax.Precision.HIGHEST
    feat = x.reshape(B, T * N, D)
    assign = jax.nn.softmax(jnp.matmul(feat, edge_clf, precision=hp), axis=-1)
    hyper_feat = jnp.matmul(jnp.swapaxes(assign, 1, 2), feat, precision=hp)
    mapped = jax.nn.relu(jnp.matmul(edge_map, hyper_feat, precision=hp))
    hyper_out = mapped + hyper_feat
    y = jax.nn.relu(jnp.matmul(assign, hyper_out, precision=hp))
    z = y.reshape(B, T, N, D) + x
    mean = jnp.mean(z, axis=-1, keepdims=True)
    var = jnp.mean((z - mean) ** 2, axis=-1, keepdims=True)
    return (z - mean) / jnp.sqrt(var + 1e-5) * gamma + beta


if __name__ == "__main__":
    # Small shapes implied by the module: x is (batch, temporal_length, num_nodes, hidden_dim),
    # E = args.num_hyper_edge (default 32 in STGCNWithHypergraphLearning).
    B, T, N, D, E = 4, 4, 8, 32, 32

    key = jax.random.PRNGKey(0)
    kx, kc, km = jax.random.split(key, 3)

    x = jax.random.normal(kx, (B, T, N, D), dtype=jnp.float32)
    # Deterministic parameter init mirroring the PyTorch module:
    #   edge_clf ~ N(0,1)/sqrt(E), edge_map ~ N(0,1)/sqrt(E), LayerNorm weight=1, bias=0.
    edge_clf = jax.random.normal(kc, (D, E), dtype=jnp.float32) / (E ** 0.5)
    edge_map = jax.random.normal(km, (E, E), dtype=jnp.float32) / (E ** 0.5)
    gamma = jnp.ones((D,), dtype=jnp.float32)
    beta = jnp.zeros((D,), dtype=jnp.float32)

    out = hypergraph_forward(x, edge_clf, edge_map, gamma, beta)
    out = jax.block_until_ready(out)

    ref = hypergraph_reference(x, edge_clf, edge_map, gamma, beta)
    assert out.shape == (B, T, N, D)
    assert jnp.allclose(out, ref, atol=2e-4, rtol=2e-4), "mismatch vs reference"

    print("KERNEL_OK")
</pallas_src>

<mosaic_0001>
module attributes {stable_mosaic.version = 11 : i64} {
  func.func @_hypergraph_kernel(%arg0: i32, %arg1: memref<1x32x32xf32, #tpu.memory_space<vmem>>, %arg2: memref<32x32xf32, #tpu.memory_space<vmem>>, %arg3: memref<32x32xf32, #tpu.memory_space<vmem>>, %arg4: memref<1x32xf32, #tpu.memory_space<vmem>>, %arg5: memref<1x32xf32, #tpu.memory_space<vmem>>, %arg6: memref<1x32x32xf32, #tpu.memory_space<vmem>>) attributes {dimension_semantics = [#tpu.dimension_semantics<parallel>], iteration_bounds = array<i64: 4>, scalar_prefetch = 0 : i64, scratch_operands = 0 : i64, tpu.core_type = #tpu.core_type<tc>, window_params = [{transform_indices = @transform_0, window_bounds = array<i64: 1, 32, 32>}, {pipeline_mode = #tpu.pipeline_mode<synchronous>, transform_indices = @transform_1, window_bounds = array<i64: 32, 32>}, {pipeline_mode = #tpu.pipeline_mode<synchronous>, transform_indices = @transform_2, window_bounds = array<i64: 32, 32>}, {pipeline_mode = #tpu.pipeline_mode<synchronous>, transform_indices = @transform_3, window_bounds = array<i64: 1, 32>}, {pipeline_mode = #tpu.pipeline_mode<synchronous>, transform_indices = @transform_4, window_bounds = array<i64: 1, 32>}, {transform_indices = @transform_5, window_bounds = array<i64: 1, 32, 32>}]} {
    %c0 = arith.constant 0 : index
    %c0_0 = arith.constant 0 : index
    %c0_1 = arith.constant 0 : index
    %0 = vector.load %arg1[%c0, %c0_0, %c0_1] : memref<1x32x32xf32, #tpu.memory_space<vmem>>, vector<1x32x32xf32>
    %1 = vector.shape_cast %0 : vector<1x32x32xf32> to vector<32x32xf32>
    %c0_2 = arith.constant 0 : index
    %c0_3 = arith.constant 0 : index
    %2 = vector.load %arg2[%c0_2, %c0_3] : memref<32x32xf32, #tpu.memory_space<vmem>>, vector<32x32xf32>
    %cst = arith.constant dense<0.000000e+00> : vector<32x32xf32>
    %3 = tpu.matmul %1, %2, %cst {dimension_numbers = #tpu.dot_dimension_numbers<[1], [0], [0], [1], [0, 0, 1, 1], [], []>} : vector<32x32xf32>, vector<32x32xf32>, vector<32x32xf32> -> vector<32x32xf32>
    %cst_4 = arith.constant dense<0xFF800000> : vector<32xf32>
    %4 = vector.multi_reduction <maximumf>, %3, %cst_4 [1] : vector<32x32xf32> to vector<32xf32>
    %5 = vector.shape_cast %4 : vector<32xf32> to vector<32x1xf32>
    %6 = vector.broadcast %5 : vector<32x1xf32> to vector<32x32xf32>
    %7 = arith.subf %3, %6 : vector<32x32xf32>
    %8 = math.exp %7 : vector<32x32xf32>
    %cst_5 = arith.constant dense<0.000000e+00> : vector<32xf32>
    %9 = vector.multi_reduction <add>, %8, %cst_5 [1] : vector<32x32xf32> to vector<32xf32>
    %10 = vector.shape_cast %9 : vector<32xf32> to vector<32x1xf32>
    %11 = vector.broadcast %10 : vector<32x1xf32> to vector<32x32xf32>
    %12 = arith.divf %8, %11 : vector<32x32xf32>
    %cst_6 = arith.constant dense<0.000000e+00> : vector<32x32xf32>
    %13 = tpu.matmul %12, %1, %cst_6 {dimension_numbers = #tpu.dot_dimension_numbers<[0], [0], [1], [1], [0, 1, 1, 1], [], []>} : vector<32x32xf32>, vector<32x32xf32>, vector<32x32xf32> -> vector<32x32xf32>
    %c0_7 = arith.constant 0 : index
    %c0_8 = arith.constant 0 : index
    %14 = vector.load %arg3[%c0_7, %c0_8] : memref<32x32xf32, #tpu.memory_space<vmem>>, vector<32x32xf32>
    %cst_9 = arith.constant dense<0.000000e+00> : vector<32x32xf32>
    %15 = tpu.matmul %14, %13, %cst_9 {dimension_numbers = #tpu.dot_dimension_numbers<[1], [0], [0], [1], [0, 0, 1, 1], [], []>} : vector<32x32xf32>, vector<32x32xf32>, vector<32x32xf32> -> vector<32x32xf32>
    %cst_10 = arith.constant 0.000000e+00 : f32
    %16 = vector.broadcast %cst_10 : f32 to vector<32x32xf32>
    %17 = arith.maximumf %15, %16 : vector<32x32xf32>
    %18 = arith.addf %17, %13 : vector<32x32xf32>
    %cst_11 = arith.constant dense<0.000000e+00> : vector<32x32xf32>
    %19 = tpu.matmul %12, %18, %cst_11 {dimension_numbers = #tpu.dot_dimension_numbers<[1], [0], [0], [1], [0, 0, 1, 1], [], []>} : vector<32x32xf32>, vector<32x32xf32>, vector<32x32xf32> -> vector<32x32xf32>
    %cst_12 = arith.constant 0.000000e+00 : f32
    %20 = vector.broadcast %cst_12 : f32 to vector<32x32xf32>
    %21 = arith.maximumf %19, %20 : vector<32x32xf32>
    %22 = arith.addf %21, %1 : vector<32x32xf32>
    %cst_13 = arith.constant dense<0.000000e+00> : vector<32xf32>
    %23 = vector.multi_reduction <add>, %22, %cst_13 [1] : vector<32x32xf32> to vector<32xf32>
    %24 = vector.shape_cast %23 : vector<32xf32> to vector<32x1xf32>
    %cst_14 = arith.constant 3.200000e+01 : f32
    %25 = vector.broadcast %cst_14 : f32 to vector<32x1xf32>
    %26 = arith.divf %24, %25 : vector<32x1xf32>
    %27 = vector.broadcast %26 : vector<32x1xf32> to vector<32x32xf32>
    %28 = arith.subf %22, %27 : vector<32x32xf32>
    %29 = arith.mulf %28, %28 : vector<32x32xf32>
    %cst_15 = arith.constant dense<0.000000e+00> : vector<32xf32>
    %30 = vector.multi_reduction <add>, %29, %cst_15 [1] : vector<32x32xf32> to vector<32xf32>
    %31 = vector.shape_cast %30 : vector<32xf32> to vector<32x1xf32>
    %cst_16 = arith.constant 3.200000e+01 : f32
    %32 = vector.broadcast %cst_16 : f32 to vector<32x1xf32>
    %33 = arith.divf %31, %32 : vector<32x1xf32>
    %cst_17 = arith.constant 9.99999974E-6 : f32
    %34 = vector.broadcast %cst_17 : f32 to vector<32x1xf32>
    %35 = arith.addf %33, %34 : vector<32x1xf32>
    %36 = math.sqrt %35 : vector<32x1xf32>
    %37 = vector.broadcast %36 : vector<32x1xf32> to vector<32x32xf32>
    %38 = arith.divf %28, %37 : vector<32x32xf32>
    %c0_18 = arith.constant 0 : index
    %c0_19 = arith.constant 0 : index
    %39 = vector.load %arg4[%c0_18, %c0_19] : memref<1x32xf32, #tpu.memory_space<vmem>>, vector<1x32xf32>
    %40 = vector.broadcast %39 : vector<1x32xf32> to vector<32x32xf32>
    %41 = arith.mulf %38, %40 : vector<32x32xf32>
    %c0_20 = arith.constant 0 : index
    %c0_21 = arith.constant 0 : index
    %42 = vector.load %arg5[%c0_20, %c0_21] : memref<1x32xf32, #tpu.memory_space<vmem>>, vector<1x32xf32>
    %43 = vector.broadcast %42 : vector<1x32xf32> to vector<32x32xf32>
    %44 = arith.addf %41, %43 : vector<32x32xf32>
    %c0_22 = arith.constant 0 : index
    %c0_23 = arith.constant 0 : index
    %c0_24 = arith.constant 0 : index
    %45 = vector.load %arg6[%c0_22, %c0_23, %c0_24] : memref<1x32x32xf32, #tpu.memory_space<vmem>>, vector<1x32x32xf32>
    %46 = vector.shape_cast %45 : vector<1x32x32xf32> to vector<32x32xf32>
    %47 = vector.shape_cast %44 : vector<32x32xf32> to vector<1x32x32xf32>
    tpu.vector_store %arg6[%c0_22, %c0_23, %c0_24], %47 {strides = array<i32>} : memref<1x32x32xf32, #tpu.memory_space<vmem>>, vector<1x32x32xf32>,
    return
  }
  func.func @transform_0(%arg0: i32) -> (i32, i32, i32) {
    %c0_i32 = arith.constant 0 : i32
    %c0_i32_0 = arith.constant 0 : i32
    %c0_i32_1 = arith.constant 0 : i32
    return %arg0, %c0_i32, %c0_i32_0 : i32, i32, i32
  }
  func.func @transform_1(%arg0: i32) -> (i32, i32) {
    %c0_i32 = arith.constant 0 : i32
    %c0_i32_0 = arith.constant 0 : i32
    %c0_i32_1 = arith.constant 0 : i32
    return %c0_i32, %c0_i32_0 : i32, i32
  }
  func.func @transform_2(%arg0: i32) -> (i32, i32) {
    %c0_i32 = arith.constant 0 : i32
    %c0_i32_0 = arith.constant 0 : i32
    %c0_i32_1 = arith.constant 0 : i32
    return %c0_i32, %c0_i32_0 : i32, i32
  }
  func.func @transform_3(%arg0: i32) -> (i32, i32) {
    %c0_i32 = arith.constant 0 : i32
    %c0_i32_0 = arith.constant 0 : i32
    %c0_i32_1 = arith.constant 0 : i32
    return %c0_i32, %c0_i32_0 : i32, i32
  }
  func.func @transform_4(%arg0: i32) -> (i32, i32) {
    %c0_i32 = arith.constant 0 : i32
    %c0_i32_0 = arith.constant 0 : i32
    %c0_i32_1 = arith.constant 0 : i32
    return %c0_i32, %c0_i32_0 : i32, i32
  }
  func.func @transform_5(%arg0: i32) -> (i32, i32, i32) {
    %c0_i32 = arith.constant 0 : i32
    %c0_i32_0 = arith.constant 0 : i32
    %c0_i32_1 = arith.constant 0 : i32
    return %arg0, %c0_i32, %c0_i32_0 : i32, i32, i32
  }
}

</mosaic_0001>

<llo_original>
// kernel: tpu_custom_call.1
$region0: #{tpu_custom_call.1}
  #allocation0 [shape = 'u32[]', space=smem, size = 0x4, offset = 0x4, fixed_abs, tag = 'smem constant byte address 0x4 - core index']
  #allocation1 [shape = 'u32[72,128]{1,0:T(1,128)}', space=vmem, size = 0x9000, scoped, tag = 'internal scratch']
  %s0 = inlined_call_operand.hbm [shape: f32[4,32,32], index: 0, kind: input, shape index: {}]
  %s1 = inlined_call_operand.hbm [shape: f32[32,32], index: 1, kind: input, shape index: {}]
  %s2 = inlined_call_operand.hbm [shape: f32[32,32], index: 2, kind: input, shape index: {}]
  %s3 = inlined_call_operand.vmem [shape: f32[1,32], index: 3, kind: input, shape index: {}]
  %s4 = inlined_call_operand.vmem [shape: f32[1,32], index: 4, kind: input, shape index: {}]
  %s5 = inlined_call_operand.hbm [shape: f32[4,32,32], index: 5, kind: output, shape index: {}]
  %s6 = sld [smem:[#allocation0]]
  $region65: #{tpu_custom_call.1} parent=0
    _
  %s8 = ssub.s32 1, %s6
  %s9 = scalar_select 0, %s8, %s6
  $region1: #{tpu_custom_call.1} parent=0
    #allocation2 [shape = 'u8[32768]{0}', space=vmem, size = 0x8000, scoped, tag = 'input window, operand 0']
    #allocation3 [shape = 's32[2]{0}', space=sflag, size = 0x8, scoped, tag = 'scoped memory for tpu_custom_call.1']
    #allocation4 [shape = 's32[2]{0}', space=sflag, size = 0x8, scoped, tag = 'scoped memory for tpu_custom_call.1']
    #allocation5 [shape = 'u8[16384]{0}', space=vmem, size = 0x4000, scoped, tag = 'input window, operand 1, single buffered']
    #allocation6 [shape = 's32[1]{0}', space=sflag, size = 0x4, scoped, tag = 'scoped memory for tpu_custom_call.1']
    #allocation7 [shape = 'u8[16384]{0}', space=vmem, size = 0x4000, scoped, tag = 'input window, operand 2, single buffered']
    #allocation8 [shape = 'u8[32768]{0}', space=vmem, size = 0x8000, scoped, tag = 'output window, operand 0']
    %10 = vsyncpa [#allocation3], 0
    %s11 = scalar_lea.sflag [#allocation3], 1
    %12 = vsyncpa %s11, 0
    %13 = vsyncpa [#allocation6], 0
    %14 = vsyncpa [#allocation4], 0
    %s15 = scalar_lea.sflag [#allocation4], 1
    %16 = vsyncpa %s15, 0
    loop: start=0, step=1, limit=6
    $region2: #{tpu_custom_call.1} parent=1 // loop_pre_header
      _
    $region3: #{tpu_custom_call.1} parent=1 // loop_header
      %s18 = sphi 0, %s22
      %p19 = scmp.ge.s32.totalorder %s18, 6
      %s28 = sphi 0, %s30
      %s31 = sphi 0, %s28
      %s32 = sphi 0, %s31
      %s48 = sphi 0, %s32
      %s52 = sphi 0, %s52
      %s54 = sphi 0, %s52
      %s55 = sphi 0, %s54
      %s69 = sphi 0, %s55
      %s73 = sphi 0, %s73
      %s75 = sphi 0, %s73
      %s76 = sphi 0, %s75
      %s90 = sphi 0, %s76
      %s94 = sphi 0, %s94
      %s96 = sphi 0, %s94
      %s97 = sphi 0, %s96
      %s111 = sphi 0, %s97
      %s115 = sphi 0, %s115
      %s117 = sphi 0, %s115
      %s118 = sphi 0, %s117
      %s132 = sphi 0, %s118
      %s138 = sphi 0, %s140
      %s141 = sphi 0, %s138
      %s142 = sphi 0, %s141
      %s158 = sphi 0, %s142
    $region4: #{tpu_custom_call.1} parent=1 // loop_header_branch
      %21 = sbr.rel (%p19) target = $region8
    $region5: #{tpu_custom_call.1} parent=1 // loop_body
      %s23 = ssub.s32 %s18, 1
      %s24 = ssub.s32 %s18, 2
      %s25 = sadd.s32 %s18, 1
      %s26 = ssub.s32 %s18, %s25
      %p27 = scmp.eq.s32.totalorder %s26, 0
      %s29 = sadd.s32 %s28, 1
      %s30 = scalar_select %p27, %s28, %s29
      %p33 = pneg %p27
      %p34 = scmp.eq.s32.totalorder %s18, 3
      %p35 = por %p33, %p34
      %p36 = scmp.ne.s32.totalorder %s28, %s31
      %p37 = scmp.eq.s32.totalorder %s18, 0
      %p38 = por %p36, %p37
      %p39 = scmp.ne.s32.totalorder %s28, %s31
      %p40 = scmp.eq.s32.totalorder %s23, 3
      %p41 = por %p39, %p40
      %p42 = scmp.ne.s32.totalorder %s31, %s32
      %p43 = scmp.eq.s32.totalorder %s23, 0
      %p44 = por %p42, %p43
      %p45 = scmp.ne.s32.totalorder %s31, %s32
      %p46 = scmp.eq.s32.totalorder %s24, 3
      %p47 = por %p45, %p46
      %p49 = scmp.ne.s32.totalorder %s32, %s48
      %p50 = scmp.eq.s32.totalorder %s24, 0
      %p51 = por %p49, %p50
      %s53 = sadd.s32 %s52, 1
      %p56 = scmp.eq.s32.totalorder %s18, 3
      %p57 = scmp.ne.s32.totalorder %s52, %s54
      %p58 = scmp.eq.s32.totalorder %s18, 0
      %p59 = por %p57, %p58
      %p60 = scmp.ne.s32.totalorder %s52, %s54
      %p61 = scmp.eq.s32.totalorder %s23, 3
      %p62 = por %p60, %p61
      %p63 = scmp.ne.s32.totalorder %s54, %s55
      %p64 = scmp.eq.s32.totalorder %s23, 0
      %p65 = por %p63, %p64
      %p66 = scmp.ne.s32.totalorder %s54, %s55
      %p67 = scmp.eq.s32.totalorder %s24, 3
      %p68 = por %p66, %p67
      %p70 = scmp.ne.s32.totalorder %s55, %s69
      %p71 = scmp.eq.s32.totalorder %s24, 0
      %p72 = por %p70, %p71
      %s74 = sadd.s32 %s73, 1
      %p77 = scmp.eq.s32.totalorder %s18, 3
      %p78 = scmp.ne.s32.totalorder %s73, %s75
      %p79 = scmp.eq.s32.totalorder %s18, 0
      %p80 = por %p78, %p79
      %p81 = scmp.ne.s32.totalorder %s73, %s75
      %p82 = scmp.eq.s32.totalorder %s23, 3
      %p83 = por %p81, %p82
      %p84 = scmp.ne.s32.totalorder %s75, %s76
      %p85 = scmp.eq.s32.totalorder %s23, 0
      %p86 = por %p84, %p85
      %p87 = scmp.ne.s32.totalorder %s75, %s76
      %p88 = scmp.eq.s32.totalorder %s24, 3
      %p89 = por %p87, %p88
      %p91 = scmp.ne.s32.totalorder %s76, %s90
      %p92 = scmp.eq.s32.totalorder %s24, 0
      %p93 = por %p91, %p92
      %s95 = sadd.s32 %s94, 1
      %p98 = scmp.eq.s32.totalorder %s18, 3
      %p99 = scmp.ne.s32.totalorder %s94, %s96
      %p100 = scmp.eq.s32.totalorder %s18, 0
      %p101 = por %p99, %p100
      %p102 = scmp.ne.s32.totalorder %s94, %s96
      %p103 = scmp.eq.s32.totalorder %s23, 3
      %p104 = por %p102, %p103
      %p105 = scmp.ne.s32.totalorder %s96, %s97
      %p106 = scmp.eq.s32.totalorder %s23, 0
      %p107 = por %p105, %p106
      %p108 = scmp.ne.s32.totalorder %s96, %s97
      %p109 = scmp.eq.s32.totalorder %s24, 3
      %p110 = por %p108, %p109
      %p112 = scmp.ne.s32.totalorder %s97, %s111
      %p113 = scmp.eq.s32.totalorder %s24, 0
      %p114 = por %p112, %p113
      %s116 = sadd.s32 %s115, 1
      %p119 = scmp.eq.s32.totalorder %s18, 3
      %p120 = scmp.ne.s32.totalorder %s115, %s117
      %p121 = scmp.eq.s32.totalorder %s18, 0
      %p122 = por %p120, %p121
      %p123 = scmp.ne.s32.totalorder %s115, %s117
      %p124 = scmp.eq.s32.totalorder %s23, 3
      %p125 = por %p123, %p124
      %p126 = scmp.ne.s32.totalorder %s117, %s118
      %p127 = scmp.eq.s32.totalorder %s23, 0
      %p128 = por %p126, %p127
      %p129 = scmp.ne.s32.totalorder %s117, %s118
      %p130 = scmp.eq.s32.totalorder %s24, 3
      %p131 = por %p129, %p130
      %p133 = scmp.ne.s32.totalorder %s118, %s132
      %p134 = scmp.eq.s32.totalorder %s24, 0
      %p135 = por %p133, %p134
      %s136 = ssub.s32 %s18, %s25
      %p137 = scmp.eq.s32.totalorder %s136, 0
      %s139 = sadd.s32 %s138, 1
      %s140 = scalar_select %p137, %s138, %s139
      %p143 = pneg %p137
      %p144 = scmp.eq.s32.totalorder %s18, 3
      %p145 = por %p143, %p144
      %p146 = scmp.ne.s32.totalorder %s138, %s141
      %p147 = scmp.eq.s32.totalorder %s18, 0
      %p148 = por %p146, %p147
      %p149 = scmp.ne.s32.totalorder %s138, %s141
      %p150 = scmp.eq.s32.totalorder %s23, 3
      %p151 = por %p149, %p150
      %p152 = scmp.ne.s32.totalorder %s141, %s142
      %p153 = scmp.eq.s32.totalorder %s23, 0
      %p154 = por %p152, %p153
      %p155 = scmp.ne.s32.totalorder %s141, %s142
      %p156 = scmp.eq.s32.totalorder %s24, 3
      %p157 = por %p155, %p156
      %p159 = scmp.ne.s32.totalorder %s142, %s158
      %p160 = scmp.eq.s32.totalorder %s24, 0
      %p161 = por %p159, %p160
      %p162 = scmp.le.s32.totalorder 1, %s18
      %p163 = scmp.lt.s32.totalorder %s18, 5
      %p164 = pnand %p162, %p163
      %p165 = pneg %p164
      // Predicated region
      $region9: #{tpu_custom_call.1} parent=5 // pred_check
        _
      $region10: #{tpu_custom_call.1} parent=5 // pred_check_branch
        %167 = sbr.rel (%p164) target = $region12
      $region11: #{tpu_custom_call.1} parent=5 // pred_region
        %s168 = ssub.s32 %s18, 1
        // Predicated region
        $region13: #{tpu_custom_call.1} parent=11 // pred_check
          %p169 = pneg %p65
        $region14: #{tpu_custom_call.1} parent=11 // pred_check_branch
          %171 = sbr.rel (%p169) target = $region16
        $region15: #{tpu_custom_call.1} parent=11 // pred_region
          %173 = vsyncadd [#allocation6], 0
          %s174 = sshll.u32 %s1, 4
          %s175 = int_to_ptr.hbm [resolvable:$true] %s174
          %s176 = sshll.u32 [#allocation5], 4
          %s177 = int_to_ptr.vmem [resolvable:$true] %s176
          %182 = dma.hbm_to_vmem [thread:$0]  %s175, 512, %s177, [#allocation6], 128, 128, 8
        $region16: #{tpu_custom_call.1} parent=11 // pred_fallthru
          _
        // Predicated region
        $region17: #{tpu_custom_call.1} parent=11 // pred_check
          %p183 = pneg %p86
        $region18: #{tpu_custom_call.1} parent=11 // pred_check_branch
          %185 = sbr.rel (%p183) target = $region20
        $region19: #{tpu_custom_call.1} parent=11 // pred_region
          %187 = vsyncadd [#allocation6], 0
          %s188 = sshll.u32 %s2, 4
          %s189 = int_to_ptr.hbm [resolvable:$true] %s188
          %s190 = sshll.u32 [#allocation7], 4
          %s191 = int_to_ptr.vmem [resolvable:$true] %s190
          %196 = dma.hbm_to_vmem [thread:$0]  %s189, 512, %s191, [#allocation6], 128, 128, 8
        $region20: #{tpu_custom_call.1} parent=11 // pred_fallthru
          _
        // Predicated region
        $region21: #{tpu_custom_call.1} parent=11 // pred_check
          %p197 = pneg %p107
        $region22: #{tpu_custom_call.1} parent=11 // pred_check_branch
          %199 = sbr.rel (%p197) target = $region24
        $region23: #{tpu_custom_call.1} parent=11 // pred_region
          _
        $region24: #{tpu_custom_call.1} parent=11 // pred_fallthru
          _
        // Predicated region
        $region25: #{tpu_custom_call.1} parent=11 // pred_check
          %p200 = pneg %p128
        $region26: #{tpu_custom_call.1} parent=11 // pred_check_branch
          %202 = sbr.rel (%p200) target = $region28
        $region27: #{tpu_custom_call.1} parent=11 // pred_region
          _
        $region28: #{tpu_custom_call.1} parent=11 // pred_fallthru
          _
      $region12: #{tpu_custom_call.1} parent=5 // pred_fallthru
        _
      %p203 = scmp.lt.s32.totalorder %s18, 4
      // Predicated region
      $region29: #{tpu_custom_call.1} parent=5 // pred_check
        %p204 = pneg %p203
      $region30: #{tpu_custom_call.1} parent=5 // pred_check_branch
        %206 = sbr.rel (%p204) target = $region32
      $region31: #{tpu_custom_call.1} parent=5 // pred_region
        // Predicated region
        $region33: #{tpu_custom_call.1} parent=31 // pred_check
          %p207 = pneg %p38
        $region34: #{tpu_custom_call.1} parent=31 // pred_check_branch
          %209 = sbr.rel (%p207) target = $region36
        $region35: #{tpu_custom_call.1} parent=31 // pred_region
          %s210 = sand.u32 %s28, 1
          %s211 = scalar_lea.sflag [#allocation3], %s210
          %s212 = sand.u32 %s28, 1
          %s213 = smul.addr %s212, 32
          %s214 = scalar_lea.vmem [#allocation2], %s213
          %216 = vsyncadd %s211, 0
          %s217 = smul.addr %s18, 4
          %s218 = smul.addr %s217, 8
          %s219 = scalar_lea.hbm %s0, %s218
          %s220 = sshll.u32 %s219, 4
          %s221 = int_to_ptr.hbm [resolvable:$true] %s220
          %s222 = sshll.u32 %s214, 4
          %s223 = int_to_ptr.vmem [resolvable:$true] %s222
          %228 = dma.hbm_to_vmem [thread:$0]  %s221, 512, %s223, %s211, 128, 128, 8
        $region36: #{tpu_custom_call.1} parent=31 // pred_fallthru
          _
      $region32: #{tpu_custom_call.1} parent=5 // pred_fallthru
        _
      %p229 = scmp.le.s32.totalorder 1, %s18
      %p230 = scmp.lt.s32.totalorder %s18, 5
      %p231 = pnand %p229, %p230
      %p232 = pneg %p231
      // Predicated region
      $region37: #{tpu_custom_call.1} parent=5 // pred_check
        _
      $region38: #{tpu_custom_call.1} parent=5 // pred_check_branch
        %234 = sbr.rel (%p231) target = $region40
      $region39: #{tpu_custom_call.1} parent=5 // pred_region
        %s235 = ssub.s32 %s18, 1
        %s236 = sand.u32 %s31, 1
        %s237 = scalar_lea.sflag [#allocation3], %s236
        %s238 = sand.u32 %s31, 1
        %s239 = smul.addr %s238, 32
        %s240 = scalar_lea.vmem [#allocation2], %s239
        // Predicated region
        $region41: #{tpu_custom_call.1} parent=39 // pred_check
          %p241 = pneg %p44
        $region42: #{tpu_custom_call.1} parent=39 // pred_check_branch
          %243 = sbr.rel (%p241) target = $region44
        $region43: #{tpu_custom_call.1} parent=39 // pred_region
          %245 = dma.done %s237, 512
        $region44: #{tpu_custom_call.1} parent=39 // pred_fallthru
          _
        // Predicated region
        $region45: #{tpu_custom_call.1} parent=39 // pred_check
          %p246 = pneg %p65
        $region46: #{tpu_custom_call.1} parent=39 // pred_check_branch
          %248 = sbr.rel (%p246) target = $region48
        $region47: #{tpu_custom_call.1} parent=39 // pred_region
          %250 = dma.done [#allocation6], 512
        $region48: #{tpu_custom_call.1} parent=39 // pred_fallthru
          _
        // Predicated region
        $region49: #{tpu_custom_call.1} parent=39 // pred_check
          %p251 = pneg %p86
        $region50: #{tpu_custom_call.1} parent=39 // pred_check_branch
          %253 = sbr.rel (%p251) target = $region52
        $region51: #{tpu_custom_call.1} parent=39 // pred_region
          %255 = dma.done [#allocation6], 512
        $region52: #{tpu_custom_call.1} parent=39 // pred_fallthru
          _
        %s256 = sand.u32 %s31, 1
        %s257 = scalar_lea.sflag [#allocation3], %s256
        %s258 = sand.u32 %s31, 1
        %s259 = smul.addr %s258, 32
        %s260 = scalar_lea.vmem [#allocation2], %s259
        %p261 = pneg %p44
        %p262 = pneg %p41
        %p263 = pneg %p65
        %p264 = pneg %p62
        %p265 = pneg %p86
        %p266 = pneg %p83
        %p267 = pneg %p107
        %p268 = pneg %p104
        %p269 = pneg %p128
        %p270 = pneg %p125
        %p271 = pneg %p154
        %p272 = pneg %p151
        %s273 = sand.u32 %s141, 1
        %s274 = scalar_lea.sflag [#allocation4], %s273
        %s275 = sand.u32 %s141, 1
        %s276 = smul.addr %s275, 32
        %s277 = scalar_lea.vmem [#allocation8], %s276
        %v278 = vld [vmem:[%s240] sm:$0xff]
        %v279 = vld [vmem:[%s240 + $0x8] sm:$0xff]
        %v280 = vld [vmem:[%s240 + $0x10] sm:$0xff]
        %v281 = vld [vmem:[%s240 + $0x18] sm:$0xff]
        %v282 = vld [vmem:[#allocation5] sm:$0xff]
        %v283 = vld [vmem:[#allocation5 + $0x8] sm:$0xff]
        %v284 = vld [vmem:[#allocation5 + $0x10] sm:$0xff]
        %v285 = vld [vmem:[#allocation5 + $0x18] sm:$0xff]
        %vm286 = vcmask 261120
        %v288 = vsel %vm286, %v278, 0
        %v291 = vsel %vm286, %v279, 0
        %v294 = vsel %vm286, %v280, 0
        %v297 = vsel %vm286, %v281, 0
        %299 = vmatpush.msra.mxu0 0.0
        %300 = vmatpush.msra.mxu0 0.0
        %301 = vmatpush.msra.mxu0 0.0
        %302 = vmatpush.msra.mxu0 0.0
        %303 = vmatpush.msra.mxu0 0.0
        %304 = vmatpush.msra.mxu0 0.0
        %305 = vmatpush.msra.mxu0 0.0
        %306 = vmatpush.msra.mxu0 0.0
        %307 = vmatpush.msra.mxu0 0.0
        %308 = vmatpush.msra.mxu0 0.0
        %309 = vmatpush.msra.mxu0 0.0
        %310 = vmatpush.msra.mxu0 0.0
        %311 = vmatpush.msra.mxu0 %v285
        %312 = vmatpush.msra.mxu0 %v284
        %313 = vmatpush.msra.mxu0 %v283
        %314 = vmatpush.msra.mxu0 %v282
        %315 = vmatmul.f32.gmra.mxu0 %v288
        %v316 = vpop.f32.mrf.mxu0
        %v317 = vadd.f32 0.0, %v316
        %318 = vmatmul.f32.gmra.mxu0 %v291
        %v319 = vpop.f32.mrf.mxu0
        %v320 = vadd.f32 0.0, %v319
        %321 = vmatmul.f32.gmra.mxu0 %v294
        %v322 = vpop.f32.mrf.mxu0
        %v323 = vadd.f32 0.0, %v322
        %324 = vmatmul.f32.gmra.mxu0 %v297
        %v325 = vpop.f32.mrf.mxu0
        %v326 = vadd.f32 0.0, %v325
        %327 = vdwg.mxu0
        %v328 = vsel %vm286, %v317, -inf
        %329 = vmax.xlane.f32.xlu0 %v328
        %v330 = vpop.xlane.xlu0 %329
        %v331 = vsel %vm286, %v320, -inf
        %332 = vmax.xlane.f32.xlu0 %v331
        %v333 = vpop.xlane.xlu0 %332
        %v334 = vsel %vm286, %v323, -inf
        %335 = vmax.xlane.f32.xlu0 %v334
        %v336 = vpop.xlane.xlu0 %335
        %v337 = vsel %vm286, %v326, -inf
        %338 = vmax.xlane.f32.xlu0 %v337
        %v339 = vpop.xlane.xlu0 %338
        %v340 = vsub.f32 %v317, %v330
        %v341 = vsub.f32 %v320, %v333
        %v342 = vsub.f32 %v323, %v336
        %v343 = vsub.f32 %v326, %v339
        %v344 = vmul.f32 %v340, 1.442695
        %v345 = vpow.pop %v344
        %v346 = vmul.f32 %v341, 1.442695
        %v347 = vpow.pop %v346
        %v348 = vmul.f32 %v342, 1.442695
        %v349 = vpow.pop %v348
        %v350 = vmul.f32 %v343, 1.442695
        %v351 = vpow.pop %v350
        %v352 = vsel %vm286, %v345, 0.0
        %353 = vadd.xlane.f32.xlu0 %v352
        %v354 = vpop.xlane.xlu0 %353
        %v355 = vsel %vm286, %v347, 0.0
        %356 = vadd.xlane.f32.xlu0 %v355
        %v357 = vpop.xlane.xlu0 %356
        %v358 = vsel %vm286, %v349, 0.0
        %359 = vadd.xlane.f32.xlu0 %v358
        %v360 = vpop.xlane.xlu0 %359
        %v361 = vsel %vm286, %v351, 0.0
        %362 = vadd.xlane.f32.xlu0 %v361
        %v363 = vpop.xlane.xlu0 %362
        %v364 = vrcp.pop %v354
        %v365 = vmul.f32 %v354, %v364
        %v366 = vsub.f32 1.0, %v365
        %v367 = vmul.f32 %v364, %v366
        %v368 = vadd.f32 %v364, %v367
        %vm369 = vweird.f32 %v354
        %vm370 = vweird.f32 %v364
        %vm371 = vmor %vm369, %vm370
        %v372 = vsel %vm371, %v364, %v368
        %v373 = vand.u32 2147483647, %v354
        %vm374 = vcmp.eq.f32.partialorder %v373, 8.507059e+37
        %v375 = vand.u32 %v354, 2147483648
        %v376 = vor.u32 1.1754944e-38, %v375
        %v377 = vsel %vm374, %v376, %v372
        %v378 = vmul.f32 %v345, %v377
        %v379 = vrcp.pop %v357
        %v380 = vmul.f32 %v357, %v379
        %v381 = vsub.f32 1.0, %v380
        %v382 = vmul.f32 %v379, %v381
        %v383 = vadd.f32 %v379, %v382
        %vm384 = vweird.f32 %v357
        %vm385 = vweird.f32 %v379
        %vm386 = vmor %vm384, %vm385
        %v387 = vsel %vm386, %v379, %v383
        %v388 = vand.u32 2147483647, %v357
        %vm389 = vcmp.eq.f32.partialorder %v388, 8.507059e+37
        %v390 = vand.u32 %v357, 2147483648
        %v391 = vor.u32 1.1754944e-38, %v390
        %v392 = vsel %vm389, %v391, %v387
        %v393 = vmul.f32 %v347, %v392
        %v394 = vrcp.pop %v360
        %v395 = vmul.f32 %v360, %v394
        %v396 = vsub.f32 1.0, %v395
        %v397 = vmul.f32 %v394, %v396
        %v398 = vadd.f32 %v394, %v397
        %vm399 = vweird.f32 %v360
        %vm400 = vweird.f32 %v394
        %vm401 = vmor %vm399, %vm400
        %v402 = vsel %vm401, %v394, %v398
        %v403 = vand.u32 2147483647, %v360
        %vm404 = vcmp.eq.f32.partialorder %v403, 8.507059e+37
        %v405 = vand.u32 %v360, 2147483648
        %v406 = vor.u32 1.1754944e-38, %v405
        %v407 = vsel %vm404, %v406, %v402
        %v408 = vmul.f32 %v349, %v407
        %v409 = vrcp.pop %v363
        %v410 = vmul.f32 %v363, %v409
        %v411 = vsub.f32 1.0, %v410
        %v412 = vmul.f32 %v409, %v411
        %v413 = vadd.f32 %v409, %v412
        %vm414 = vweird.f32 %v363
        %vm415 = vweird.f32 %v409
        %vm416 = vmor %vm414, %vm415
        %v417 = vsel %vm416, %v409, %v413
        %v418 = vand.u32 2147483647, %v363
        %vm419 = vcmp.eq.f32.partialorder %v418, 8.507059e+37
        %v420 = vand.u32 %v363, 2147483648
        %v421 = vor.u32 1.1754944e-38, %v420
        %v422 = vsel %vm419, %v421, %v417
        %v423 = vmul.f32 %v351, %v422
        %424 = vxpose.xlu0.b32.start [1/16] %v378, 128
        %425 = vxpose.xlu0.b32.cont [2/16] %v393, 128
        %426 = vxpose.xlu0.b32.cont [3/16] %v408, 128
        %427 = vxpose.xlu0.b32.cont [4/16] %v423, 128
        %428 = vxpose.xlu0.b32.cont [5/16] 0.0, 128
        %429 = vxpose.xlu0.b32.cont [6/16] 0.0, 128
        %430 = vxpose.xlu0.b32.cont [7/16] 0.0, 128
        %431 = vxpose.xlu0.b32.cont [8/16] 0.0, 128
        %432 = vxpose.xlu0.b32.cont [9/16] 0.0, 128
        %433 = vxpose.xlu0.b32.cont [10/16] 0.0, 128
        %434 = vxpose.xlu0.b32.cont [11/16] 0.0, 128
        %435 = vxpose.xlu0.b32.cont [12/16] 0.0, 128
        %436 = vxpose.xlu0.b32.cont [13/16] 0.0, 128
        %437 = vxpose.xlu0.b32.cont [14/16] 0.0, 128
        %438 = vxpose.xlu0.b32.cont [15/16] 0.0, 128
        %439 = vxpose.xlu0.b32.end [16/16] 0.0, 128
        %v440 = vpop.trf.xlu0
        %v441 = vpop.trf.xlu0
        %v442 = vpop.trf.xlu0
        %v443 = vpop.trf.xlu0
        %v444 = vpop.trf.xlu0
        %v445 = vpop.trf.xlu0
        %v446 = vpop.trf.xlu0
        %v447 = vpop.trf.xlu0
        %v448 = vpop.trf.xlu0
        %v449 = vpop.trf.xlu0
        %v450 = vpop.trf.xlu0
        %v451 = vpop.trf.xlu0
        %v452 = vpop.trf.xlu0
        %v453 = vpop.trf.xlu0
        %v454 = vpop.trf.xlu0
        %v455 = vpop.trf.xlu0
        %v457 = vsel %vm286, %v440, 0
        %v460 = vsel %vm286, %v441, 0
        %v463 = vsel %vm286, %v442, 0
        %v466 = vsel %vm286, %v443, 0
        %468 = vmatpush.msra.mxu0 0.0
        %469 = vmatpush.msra.mxu0 0.0
        %470 = vmatpush.msra.mxu0 0.0
        %471 = vmatpush.msra.mxu0 0.0
        %472 = vmatpush.msra.mxu0 0.0
        %473 = vmatpush.msra.mxu0 0.0
        %474 = vmatpush.msra.mxu0 0.0
        %475 = vmatpush.msra.mxu0 0.0
        %476 = vmatpush.msra.mxu0 0.0
        %477 = vmatpush.msra.mxu0 0.0
        %478 = vmatpush.msra.mxu0 0.0
        %479 = vmatpush.msra.mxu0 0.0
        %480 = vmatpush.msra.mxu0 %v281
        %481 = vmatpush.msra.mxu0 %v280
        %482 = vmatpush.msra.mxu0 %v279
        %483 = vmatpush.msra.mxu0 %v278
        %484 = vmatmul.f32.gmra.mxu0 %v457
        %v485 = vpop.f32.mrf.mxu0
        %v486 = vadd.f32 0.0, %v485
        %487 = vmatmul.f32.gmra.mxu0 %v460
        %v488 = vpop.f32.mrf.mxu0
        %v489 = vadd.f32 0.0, %v488
        %490 = vmatmul.f32.gmra.mxu0 %v463
        %v491 = vpop.f32.mrf.mxu0
        %v492 = vadd.f32 0.0, %v491
        %493 = vmatmul.f32.gmra.mxu0 %v466
        %v494 = vpop.f32.mrf.mxu0
        %v495 = vadd.f32 0.0, %v494
        %496 = vdwg.mxu0
        %v497 = vld [vmem:[#allocation7] sm:$0xff]
        %v498 = vld [vmem:[#allocation7 + $0x8] sm:$0xff]
        %v499 = vld [vmem:[#allocation7 + $0x10] sm:$0xff]
        %v500 = vld [vmem:[#allocation7 + $0x18] sm:$0xff]
        %v502 = vsel %vm286, %v497, 0
        %v505 = vsel %vm286, %v498, 0
        %v508 = vsel %vm286, %v499, 0
        %v511 = vsel %vm286, %v500, 0
        %513 = vmatpush.msra.mxu0 0.0
        %514 = vmatpush.msra.mxu0 0.0
        %515 = vmatpush.msra.mxu0 0.0
        %516 = vmatpush.msra.mxu0 0.0
        %517 = vmatpush.msra.mxu0 0.0
        %518 = vmatpush.msra.mxu0 0.0
        %519 = vmatpush.msra.mxu0 0.0
        %520 = vmatpush.msra.mxu0 0.0
        %521 = vmatpush.msra.mxu0 0.0
        %522 = vmatpush.msra.mxu0 0.0
        %523 = vmatpush.msra.mxu0 0.0
        %524 = vmatpush.msra.mxu0 0.0
        %525 = vmatpush.msra.mxu0 %v495
        %526 = vmatpush.msra.mxu0 %v492
        %527 = vmatpush.msra.mxu0 %v489
        %528 = vmatpush.msra.mxu0 %v486
        %529 = vmatmul.f32.gmra.mxu0 %v502
        %v530 = vpop.f32.mrf.mxu0
        %v531 = vadd.f32 0.0, %v530
        %532 = vmatmul.f32.gmra.mxu0 %v505
        %v533 = vpop.f32.mrf.mxu0
        %v534 = vadd.f32 0.0, %v533
        %535 = vmatmul.f32.gmra.mxu0 %v508
        %v536 = vpop.f32.mrf.mxu0
        %v537 = vadd.f32 0.0, %v536
        %538 = vmatmul.f32.gmra.mxu0 %v511
        %v539 = vpop.f32.mrf.mxu0
        %v540 = vadd.f32 0.0, %v539
        %541 = vdwg.mxu0
        %v542 = vmax.f32 %v531, 0.0
        %v543 = vmax.f32 %v534, 0.0
        %v544 = vmax.f32 %v537, 0.0
        %v545 = vmax.f32 %v540, 0.0
        %v546 = vadd.f32 %v542, %v486
        %v547 = vadd.f32 %v543, %v489
        %v548 = vadd.f32 %v544, %v492
        %v549 = vadd.f32 %v545, %v495
        %v551 = vsel %vm286, %v378, 0
        %v554 = vsel %vm286, %v393, 0
        %v557 = vsel %vm286, %v408, 0
        %v560 = vsel %vm286, %v423, 0
        %562 = vmatpush.msra.mxu0 0.0
        %563 = vmatpush.msra.mxu0 0.0
        %564 = vmatpush.msra.mxu0 0.0
        %565 = vmatpush.msra.mxu0 0.0
        %566 = vmatpush.msra.mxu0 0.0
        %567 = vmatpush.msra.mxu0 0.0
        %568 = vmatpush.msra.mxu0 0.0
        %569 = vmatpush.msra.mxu0 0.0
        %570 = vmatpush.msra.mxu0 0.0
        %571 = vmatpush.msra.mxu0 0.0
        %572 = vmatpush.msra.mxu0 0.0
        %573 = vmatpush.msra.mxu0 0.0
        %574 = vmatpush.msra.mxu0 %v549
        %575 = vmatpush.msra.mxu0 %v548
        %576 = vmatpush.msra.mxu0 %v547
        %577 = vmatpush.msra.mxu0 %v546
        %578 = vmatmul.f32.gmra.mxu0 %v551
        %v579 = vpop.f32.mrf.mxu0
        %v580 = vadd.f32 0.0, %v579
        %581 = vmatmul.f32.gmra.mxu0 %v554
        %v582 = vpop.f32.mrf.mxu0
        %v583 = vadd.f32 0.0, %v582
        %584 = vmatmul.f32.gmra.mxu0 %v557
        %v585 = vpop.f32.mrf.mxu0
        %v586 = vadd.f32 0.0, %v585
        %587 = vmatmul.f32.gmra.mxu0 %v560
        %v588 = vpop.f32.mrf.mxu0
        %v589 = vadd.f32 0.0, %v588
        %590 = vdwg.mxu0
        %v591 = vmax.f32 %v580, 0.0
        %v592 = vmax.f32 %v583, 0.0
        %v593 = vmax.f32 %v586, 0.0
        %v594 = vmax.f32 %v589, 0.0
        %v595 = vadd.f32 %v591, %v278
        %v596 = vadd.f32 %v592, %v279
        %v597 = vadd.f32 %v593, %v280
        %v598 = vadd.f32 %v594, %v281
        %v599 = vsel %vm286, %v595, 0.0
        %600 = vadd.xlane.f32.xlu0 %v599
        %v601 = vpop.xlane.xlu0 %600
        %v602 = vsel %vm286, %v596, 0.0
        %603 = vadd.xlane.f32.xlu0 %v602
        %v604 = vpop.xlane.xlu0 %603
        %v605 = vsel %vm286, %v597, 0.0
        %606 = vadd.xlane.f32.xlu0 %v605
        %v607 = vpop.xlane.xlu0 %606
        %v608 = vsel %vm286, %v598, 0.0
        %609 = vadd.xlane.f32.xlu0 %v608
        %v610 = vpop.xlane.xlu0 %609
        %v611 = vrcp.pop 32.0
        %v612 = vmul.f32 32.0, %v611
        %v613 = vsub.f32 1.0, %v612
        %v614 = vmul.f32 %v611, %v613
        %v615 = vadd.f32 %v611, %v614
        %vm616 = vweird.f32 %v611
        %v617 = vsel %vm616, %v611, %v615
        %v618 = vmul.f32 %v601, %v617
        %v619 = vmul.f32 %v604, %v617
        %v620 = vmul.f32 %v607, %v617
        %v621 = vmul.f32 %v610, %v617
        %v622 = vsub.f32 %v595, %v618
        %v623 = vsub.f32 %v596, %v619
        %v624 = vsub.f32 %v597, %v620
        %v625 = vsub.f32 %v598, %v621
        %v626 = vmul.f32 %v622, %v622
        %v627 = vmul.f32 %v623, %v623
        %v628 = vmul.f32 %v624, %v624
        %v629 = vmul.f32 %v625, %v625
        %v630 = vsel %vm286, %v626, 0.0
        %631 = vadd.xlane.f32.xlu0 %v630
        %v632 = vpop.xlane.xlu0 %631
        %v633 = vsel %vm286, %v627, 0.0
        %634 = vadd.xlane.f32.xlu0 %v633
        %v635 = vpop.xlane.xlu0 %634
        %v636 = vsel %vm286, %v628, 0.0
        %637 = vadd.xlane.f32.xlu0 %v636
        %v638 = vpop.xlane.xlu0 %637
        %v639 = vsel %vm286, %v629, 0.0
        %640 = vadd.xlane.f32.xlu0 %v639
        %v641 = vpop.xlane.xlu0 %640
        %v642 = vmul.f32 %v632, %v617
        %v643 = vmul.f32 %v635, %v617
        %v644 = vmul.f32 %v638, %v617
        %v645 = vmul.f32 %v641, %v617
        %v646 = vadd.f32 %v642, 1e-05
        %v647 = vadd.f32 %v643, 1e-05
        %v648 = vadd.f32 %v644, 1e-05
        %v649 = vadd.f32 %v645, 1e-05
        %v650 = vrsqrt.pop %v646
        %v651 = vmul.f32 %v650, %v646
        %v652 = vmul.f32 %v651, %v650
        %v653 = vmul.f32 0.5, %v652
        %v654 = vsub.f32 1.5, %v653
        %v655 = vmul.f32 %v650, %v654
        %v656 = vmul.f32 %v646, %v655
        %vm657 = vcmp.eq.f32.partialorder %v646, inf
        %v658 = vsel %vm657, %v646, %v656
        %vm659 = vcmp.eq.f32.partialorder %v646, 0.0
        %v660 = vand.u32 %v646, 2147483648
        %v661 = vsel %vm659, %v660, %v658
        %v662 = vrsqrt.pop %v647
        %v663 = vmul.f32 %v662, %v647
        %v664 = vmul.f32 %v663, %v662
        %v665 = vmul.f32 0.5, %v664
        %v666 = vsub.f32 1.5, %v665
        %v667 = vmul.f32 %v662, %v666
        %v668 = vmul.f32 %v647, %v667
        %vm669 = vcmp.eq.f32.partialorder %v647, inf
        %v670 = vsel %vm669, %v647, %v668
        %vm671 = vcmp.eq.f32.partialorder %v647, 0.0
        %v672 = vand.u32 %v647, 2147483648
        %v673 = vsel %vm671, %v672, %v670
        %v674 = vrsqrt.pop %v648
        %v675 = vmul.f32 %v674, %v648
        %v676 = vmul.f32 %v675, %v674
        %v677 = vmul.f32 0.5, %v676
        %v678 = vsub.f32 1.5, %v677
        %v679 = vmul.f32 %v674, %v678
        %v680 = vmul.f32 %v648, %v679
        %vm681 = vcmp.eq.f32.partialorder %v648, inf
        %v682 = vsel %vm681, %v648, %v680
        %vm683 = vcmp.eq.f32.partialorder %v648, 0.0
        %v684 = vand.u32 %v648, 2147483648
        %v685 = vsel %vm683, %v684, %v682
        %v686 = vrsqrt.pop %v649
        %v687 = vmul.f32 %v686, %v649
        %v688 = vmul.f32 %v687, %v686
        %v689 = vmul.f32 0.5, %v688
        %v690 = vsub.f32 1.5, %v689
        %v691 = vmul.f32 %v686, %v690
        %v692 = vmul.f32 %v649, %v691
        %vm693 = vcmp.eq.f32.partialorder %v649, inf
        %v694 = vsel %vm693, %v649, %v692
        %vm695 = vcmp.eq.f32.partialorder %v649, 0.0
        %v696 = vand.u32 %v649, 2147483648
        %v697 = vsel %vm695, %v696, %v694
        %v698 = vrcp.pop %v661
        %v699 = vmul.f32 %v661, %v698
        %v700 = vsub.f32 1.0, %v699
        %v701 = vmul.f32 %v698, %v700
        %v702 = vadd.f32 %v698, %v701
        %vm703 = vweird.f32 %v661
        %vm704 = vweird.f32 %v698
        %vm705 = vmor %vm703, %vm704
        %v706 = vsel %vm705, %v698, %v702
        %v707 = vand.u32 2147483647, %v661
        %vm708 = vcmp.eq.f32.partialorder %v707, 8.507059e+37
        %v709 = vand.u32 %v661, 2147483648
        %v710 = vor.u32 1.1754944e-38, %v709
        %v711 = vsel %vm708, %v710, %v706
        %v712 = vmul.f32 %v622, %v711
        %v713 = vrcp.pop %v673
        %v714 = vmul.f32 %v673, %v713
        %v715 = vsub.f32 1.0, %v714
        %v716 = vmul.f32 %v713, %v715
        %v717 = vadd.f32 %v713, %v716
        %vm718 = vweird.f32 %v673
        %vm719 = vweird.f32 %v713
        %vm720 = vmor %vm718, %vm719
        %v721 = vsel %vm720, %v713, %v717
        %v722 = vand.u32 2147483647, %v673
        %vm723 = vcmp.eq.f32.partialorder %v722, 8.507059e+37
        %v724 = vand.u32 %v673, 2147483648
        %v725 = vor.u32 1.1754944e-38, %v724
        %v726 = vsel %vm723, %v725, %v721
        %v727 = vmul.f32 %v623, %v726
        %v728 = vrcp.pop %v685
        %v729 = vmul.f32 %v685, %v728
        %v730 = vsub.f32 1.0, %v729
        %v731 = vmul.f32 %v728, %v730
        %v732 = vadd.f32 %v728, %v731
        %vm733 = vweird.f32 %v685
        %vm734 = vweird.f32 %v728
        %vm735 = vmor %vm733, %vm734
        %v736 = vsel %vm735, %v728, %v732
        %v737 = vand.u32 2147483647, %v685
        %vm738 = vcmp.eq.f32.partialorder %v737, 8.507059e+37
        %v739 = vand.u32 %v685, 2147483648
        %v740 = vor.u32 1.1754944e-38, %v739
        %v741 = vsel %vm738, %v740, %v736
        %v742 = vmul.f32 %v624, %v741
        %v743 = vrcp.pop %v697
        %v744 = vmul.f32 %v697, %v743
        %v745 = vsub.f32 1.0, %v744
        %v746 = vmul.f32 %v743, %v745
        %v747 = vadd.f32 %v743, %v746
        %vm748 = vweird.f32 %v697
        %vm749 = vweird.f32 %v743
        %vm750 = vmor %vm748, %vm749
        %v751 = vsel %vm750, %v743, %v747
        %v752 = vand.u32 2147483647, %v697
        %vm753 = vcmp.eq.f32.partialorder %v752, 8.507059e+37
        %v754 = vand.u32 %v697, 2147483648
        %v755 = vor.u32 1.1754944e-38, %v754
        %v756 = vsel %vm753, %v755, %v751
        %v757 = vmul.f32 %v625, %v756
        %v758 = vld [vmem:[%s3] sm:$0x1]
        %v760 = vperm.slane %v758, 0
        %v762 = vmul.f32 %v712, %v760
        %v763 = vmul.f32 %v727, %v760
        %v764 = vmul.f32 %v742, %v760
        %v765 = vmul.f32 %v757, %v760
        %v766 = vld [vmem:[%s4] sm:$0x1]
        %v768 = vperm.slane %v766, 0
        %v770 = vadd.f32 %v762, %v768
        %v771 = vadd.f32 %v763, %v768
        %v772 = vadd.f32 %v764, %v768
        %v773 = vadd.f32 %v765, %v768
        %774 = vst.msk [vmem:[%s277] sm:$0xff] %vm286, %v770
        %775 = vst.msk [vmem:[%s277 + $0x8] sm:$0xff] %vm286, %v771
        %776 = vst.msk [vmem:[%s277 + $0x10] sm:$0xff] %vm286, %v772
        %777 = vst.msk [vmem:[%s277 + $0x18] sm:$0xff] %vm286, %v773
        %s778 = sand.u32 %s141, 1
        %s779 = scalar_lea.sflag [#allocation4], %s778
        %s780 = sand.u32 %s141, 1
        %s781 = smul.addr %s780, 32
        %s782 = scalar_lea.vmem [#allocation8], %s781
        // Predicated region
        $region53: #{tpu_custom_call.1} parent=39 // pred_check
          %p783 = pneg %p151
        $region54: #{tpu_custom_call.1} parent=39 // pred_check_branch
          %785 = sbr.rel (%p783) target = $region56
        $region55: #{tpu_custom_call.1} parent=39 // pred_region
          %787 = vsyncadd %s779, 0
          %s788 = smul.addr %s23, 4
          %s789 = smul.addr %s788, 8
          %s790 = scalar_lea.hbm %s5, %s789
          %s791 = sshll.u32 %s782, 4
          %s792 = int_to_ptr.vmem [resolvable:$true] %s791
          %s793 = sshll.u32 %s790, 4
          %s794 = int_to_ptr.hbm [resolvable:$true] %s793
          %799 = dma.vmem_to_hbm [thread:$0]  %s792, 512, %s794, %s779, 128, 128, 8
        $region56: #{tpu_custom_call.1} parent=39 // pred_fallthru
          _
      $region40: #{tpu_custom_call.1} parent=5 // pred_fallthru
        _
      %p800 = scmp.le.s32.totalorder 2, %s18
      // Predicated region
      $region57: #{tpu_custom_call.1} parent=5 // pred_check
        %p801 = pneg %p800
      $region58: #{tpu_custom_call.1} parent=5 // pred_check_branch
        %803 = sbr.rel (%p801) target = $region60
      $region59: #{tpu_custom_call.1} parent=5 // pred_region
        %s804 = ssub.s32 %s18, 2
        // Predicated region
        $region61: #{tpu_custom_call.1} parent=59 // pred_check
          %p805 = pneg %p157
        $region62: #{tpu_custom_call.1} parent=59 // pred_check_branch
          %807 = sbr.rel (%p805) target = $region64
        $region63: #{tpu_custom_call.1} parent=59 // pred_region
          %s808 = sand.u32 %s142, 1
          %s809 = scalar_lea.sflag [#allocation4], %s808
          %s810 = sand.u32 %s142, 1
          %s811 = smul.addr %s810, 32
          %s812 = scalar_lea.vmem [#allocation8], %s811
          %814 = dma.done %s809, 512
        $region64: #{tpu_custom_call.1} parent=59 // pred_fallthru
          _
      $region60: #{tpu_custom_call.1} parent=5 // pred_fallthru
        _
    $region6: #{tpu_custom_call.1} parent=1 // loop_footer
      %s22 = sadd.s32 1, %s18
    $region7: #{tpu_custom_call.1} parent=1 // loop_footer_branch
      %17 = sbr.rel target = $region3
    $region8: #{tpu_custom_call.1} parent=1 // loop_exit
      _
    %815 = vsyncpa [#allocation3], 1
    %s816 = scalar_lea.sflag [#allocation3], 1
    %817 = vsyncpa %s816, 1
    %818 = vsyncpa [#allocation6], 1
    %819 = vsyncpa [#allocation4], 1
    %s820 = scalar_lea.sflag [#allocation4], 1
    %821 = vsyncpa %s820, 1

</llo_original>
